<compile_context>
chip_gen: v7x
topology: tpu7x:2x2x1
jax: 0.10.0
libtpu: 0.0.40
codegen_flags: <defaults>
</compile_context>

<pallas_src>
import functools

import jax
import jax.numpy as jnp
from jax.experimental import pallas as pl
from jax.experimental.pallas import tpu as pltpu


def _round_up(x, m):
    return ((x + m - 1) // m) * m


# ---------------------------------------------------------------------------
# Kernels
# ---------------------------------------------------------------------------
def _make_train_kernel(tile_b, b_true, out_dim, need_mask):
    """BCE-with-logits mean loss, accumulated across the batch grid."""
    inv_denom = 1.0 / float(b_true * out_dim)

    def kernel(x_ref, w_ref, b_ref, y_ref, loss_ref, acc_ref):
        pid = pl.program_id(0)

        @pl.when(pid == 0)
        def _():
            acc_ref[0, 0] = jnp.float32(0.0)

        # [tile_b, H] bf16 @ [H, 4] bf16 -> f32 on the MXU.
        z = jnp.dot(x_ref[...], w_ref[...],
                    preferred_element_type=jnp.float32)
        z = z + b_ref[...].astype(jnp.float32)               # [tile_b, 4]
        y = y_ref[...].astype(jnp.float32)

        # Stable BCE from logits: max(z,0) - z*y + log1p(exp(-|z|)).
        # Equals -(y*log(sigmoid(z)) + (1-y)*log(1-sigmoid(z))) in exact math;
        # clamp per-element loss at 100 to emulate PyTorch BCELoss' -100 log clamp.
        nll = jnp.maximum(z, 0.0) - z * y + jnp.log1p(jnp.exp(-jnp.abs(z)))
        nll = jnp.minimum(nll, 100.0)

        if need_mask:  # zero out rows that are only batch padding
            rows = pid * tile_b + jax.lax.broadcasted_iota(jnp.int32, nll.shape, 0)
            nll = jnp.where(rows < b_true, nll, 0.0)

        acc_ref[0, 0] = acc_ref[0, 0] + jnp.sum(nll)
        # Cheap scalar SMEM store each step; final step leaves the true mean.
        loss_ref[0, 0] = acc_ref[0, 0] * inv_denom

    return kernel


def _eval_kernel(x_ref, w_ref, b_ref, pred_ref):
    """predict = sigmoid(x @ W + b) for one batch tile."""
    z = jnp.dot(x_ref[...], w_ref[...], preferred_element_type=jnp.float32)
    z = z + b_ref[...].astype(jnp.float32)                   # [tile_b, 4]
    e = jnp.exp(-z)                                          # EUP
    p = pl.reciprocal(1.0 + e, approx=True)                  # EUP (frees VALU divide)
    pred_ref[...] = p.astype(pred_ref.dtype)


# ---------------------------------------------------------------------------
# Wrapper
# ---------------------------------------------------------------------------
def classify_model_forward(tensors, weight_t, bias, labels=None,
                           mode="train", max_tile_b=512):
    """tensors: [B, H]; weight_t: [H, 4] (pre-transposed); bias: [1, 4];
    labels: [B, 4] (train only)."""
    B, H = tensors.shape
    out_dim = weight_t.shape[1]

    # bf16 activations/weights on the wire; f32 accumulation inside.
    x = tensors.astype(jnp.bfloat16)
    w = weight_t.astype(jnp.bfloat16)
    b = bias.reshape(1, out_dim).astype(jnp.float32)

    # Batch tile: multiple of 8 sublanes, capped at max_tile_b rows.
    tile_b = min(max_tile_b, _round_up(B, 8))
    B_pad = _round_up(B, tile_b)
    if B_pad != B:
        x = jnp.pad(x, ((0, B_pad - B), (0, 0)))
    grid = (B_pad // tile_b,)

    x_spec = pl.BlockSpec((tile_b, H), lambda i: (i, 0))
    w_spec = pl.BlockSpec((H, out_dim), lambda i: (0, 0))     # grid-invariant
    b_spec = pl.BlockSpec((1, out_dim), lambda i: (0, 0))     # grid-invariant

    if mode == "train":
        y = labels.astype(jnp.float32)
        if B_pad != B:
            y = jnp.pad(y, ((0, B_pad - B), (0, 0)))
        y_spec = pl.BlockSpec((tile_b, out_dim), lambda i: (i, 0))

        cost = pl.CostEstimate(
            flops=2 * B_pad * H * out_dim + 8 * B_pad * out_dim,
            transcendentals=2 * B_pad * out_dim,
            bytes_accessed=(x.size * 2 + w.size * 2 + b.size * 4 + y.size * 4 + 4),
        )
        kernel = _make_train_kernel(tile_b, B, out_dim, need_mask=(B_pad != B))
        loss = pl.pallas_call(
            kernel,
            out_shape=jax.ShapeDtypeStruct((1, 1), jnp.float32),
            grid_spec=pltpu.PrefetchScalarGridSpec(
                num_scalar_prefetch=0,
                grid=grid,
                in_specs=[x_spec, w_spec, b_spec, y_spec],
                out_specs=pl.BlockSpec(memory_space=pltpu.MemorySpace.SMEM),
                scratch_shapes=[pltpu.SMEM((1, 1), jnp.float32)],
            ),
            compiler_params=pltpu.CompilerParams(
                dimension_semantics=("arbitrary",)),   # loss accumulates serially
            cost_estimate=cost,
        )(x, w, b, y)
        return loss[0, 0]

    # eval / inference path: no labels, no loss, sigmoid probabilities out.
    cost = pl.CostEstimate(
        flops=2 * B_pad * H * out_dim + 2 * B_pad * out_dim,
        transcendentals=2 * B_pad * out_dim,
        bytes_accessed=(x.size * 2 + w.size * 2 + b.size * 4
                        + B_pad * out_dim * 4),
    )
    pred = pl.pallas_call(
        _eval_kernel,
        out_shape=jax.ShapeDtypeStruct((B_pad, out_dim), jnp.float32),
        grid_spec=pltpu.PrefetchScalarGridSpec(
            num_scalar_prefetch=0,
            grid=grid,
            in_specs=[x_spec, w_spec, b_spec],
            out_specs=pl.BlockSpec((tile_b, out_dim), lambda i: (i, 0)),
        ),
        compiler_params=pltpu.CompilerParams(
            dimension_semantics=("parallel",)),        # independent batch tiles
        cost_estimate=cost,
    )(x, w, b)
    return pred[:B]


def init_params(key, hidden_size, out_dim=4):
    # PyTorch nn.Linear default init: U(-1/sqrt(H), 1/sqrt(H)).
    k_w, k_b = jax.random.split(key)
    bound = 1.0 / jnp.sqrt(jnp.float32(hidden_size))
    # Store weight transposed: [H, out_dim]  (PyTorch stores [out_dim, H]).
    weight_t = jax.random.uniform(k_w, (hidden_size, out_dim), jnp.float32, -bound, bound)
    bias = jax.random.uniform(k_b, (1, out_dim), jnp.float32, -bound, bound)
    return weight_t, bias


# ---------------------------------------------------------------------------
# Demo / self-check
# ---------------------------------------------------------------------------
def _reference(tensors, weight_t, bias, labels):
    # Reference built from the same bf16-rounded inputs the kernel consumes.
    x = tensors.astype(jnp.bfloat16).astype(jnp.float32)
    w = weight_t.astype(jnp.bfloat16).astype(jnp.float32)
    logits = x @ w + bias
    p = jax.nn.sigmoid(logits)
    log_p = jnp.maximum(jnp.log(p), -100.0)
    log_1mp = jnp.maximum(jnp.log(1.0 - p), -100.0)
    loss = jnp.mean(-(labels * log_p + (1.0 - labels) * log_1mp))
    return p, loss


if __name__ == "__main__":
    key = jax.random.PRNGKey(0)
    H = 32  # small bert_hidden_size for the demo

    for B in (8, 20):  # B=20 exercises the padding/masking path
        k_x, k_y, k_p = jax.random.split(jax.random.fold_in(key, B), 3)
        tensors = jax.random.normal(k_x, (B, H), jnp.float32)
        labels = jax.random.bernoulli(k_y, 0.5, (B, 4)).astype(jnp.float32)
        weight_t, bias = init_params(k_p, H)

        # train mode -> scalar BCE loss
        loss = classify_model_forward(tensors, weight_t, bias, labels, mode="train")
        loss = jax.block_until_ready(loss)

        # eval mode -> sigmoid predictions
        predict = classify_model_forward(tensors, weight_t, bias, mode="eval")
        predict = jax.block_until_ready(predict)

        p_ref, loss_ref = _reference(tensors, weight_t, bias, labels)
        assert predict.shape == (B, 4), f"bad predict shape {predict.shape}"
        assert jnp.allclose(predict, p_ref, atol=2e-3), "predict mismatch"
        assert jnp.allclose(loss, loss_ref, atol=2e-3), "loss mismatch"

    print("KERNEL_OK")
</pallas_src>

<mosaic_0001>
module attributes {stable_mosaic.version = 11 : i64} {
  func.func @kernel(%arg0: i32, %arg1: memref<8x32xbf16, #tpu.memory_space<vmem>>, %arg2: memref<32x4xbf16, #tpu.memory_space<vmem>>, %arg3: memref<1x4xf32, #tpu.memory_space<vmem>>, %arg4: memref<8x4xf32, #tpu.memory_space<vmem>>, %arg5: memref<1x1xf32, #tpu.memory_space<smem>>, %arg6: memref<1x1xf32, #tpu.memory_space<smem>>) attributes {dimension_semantics = [#tpu.dimension_semantics<arbitrary>], iteration_bounds = array<i64: 1>, scalar_prefetch = 0 : i64, scratch_operands = 1 : i64, tpu.core_type = #tpu.core_type<tc>, window_params = [{transform_indices = @transform_0, window_bounds = array<i64: 8, 32>}, {pipeline_mode = #tpu.pipeline_mode<synchronous>, transform_indices = @transform_1, window_bounds = array<i64: 32, 4>}, {pipeline_mode = #tpu.pipeline_mode<synchronous>, transform_indices = @transform_2, window_bounds = array<i64: 1, 4>}, {transform_indices = @transform_3, window_bounds = array<i64: 8, 4>}, {transform_indices = @transform_4, window_bounds = array<i64: 1, 1>}]} {
    %c0_i32 = arith.constant 0 : i32
    %0 = arith.cmpi eq, %arg0, %c0_i32 : i32
    %1 = arith.extui %0 : i1 to i32
    %c0_i32_0 = arith.constant 0 : i32
    %2 = arith.cmpi ne, %1, %c0_i32_0 : i32
    scf.if %2 {
      %cst_21 = arith.constant 0.000000e+00 : f32
      %c0_22 = arith.constant 0 : index
      %c0_23 = arith.constant 0 : index
      %32 = memref.load %arg6[%c0_22, %c0_23] : memref<1x1xf32, #tpu.memory_space<smem>>
      memref.store %cst_21, %arg6[%c0_22, %c0_23] : memref<1x1xf32, #tpu.memory_space<smem>>
    } else {
    }
    %c0 = arith.constant 0 : index
    %c0_1 = arith.constant 0 : index
    %3 = vector.load %arg1[%c0, %c0_1] : memref<8x32xbf16, #tpu.memory_space<vmem>>, vector<8x32xbf16>
    %c0_2 = arith.constant 0 : index
    %c0_3 = arith.constant 0 : index
    %4 = vector.load %arg2[%c0_2, %c0_3] : memref<32x4xbf16, #tpu.memory_space<vmem>>, vector<32x4xbf16>
    %cst = arith.constant dense<0.000000e+00> : vector<8x4xf32>
    %5 = tpu.matmul %3, %4, %cst {dimension_numbers = #tpu.dot_dimension_numbers<[1], [0], [0], [1], [0, 0, 1, 1], [], []>} : vector<8x32xbf16>, vector<32x4xbf16>, vector<8x4xf32> -> vector<8x4xf32>
    %c0_4 = arith.constant 0 : index
    %c0_5 = arith.constant 0 : index
    %6 = vector.load %arg3[%c0_4, %c0_5] : memref<1x4xf32, #tpu.memory_space<vmem>>, vector<1x4xf32>
    %7 = vector.broadcast %6 : vector<1x4xf32> to vector<8x4xf32>
    %8 = arith.addf %5, %7 : vector<8x4xf32>
    %c0_6 = arith.constant 0 : index
    %c0_7 = arith.constant 0 : index
    %9 = vector.load %arg4[%c0_6, %c0_7] : memref<8x4xf32, #tpu.memory_space<vmem>>, vector<8x4xf32>
    %cst_8 = arith.constant 0.000000e+00 : f32
    %10 = vector.broadcast %cst_8 : f32 to vector<8x4xf32>
    %11 = arith.maximumf %8, %10 : vector<8x4xf32>
    %12 = arith.mulf %8, %9 : vector<8x4xf32>
    %13 = arith.subf %11, %12 : vector<8x4xf32>
    %14 = math.absf %8 : vector<8x4xf32>
    %cst_9 = arith.constant 0.000000e+00 : f32
    %15 = vector.broadcast %cst_9 : f32 to vector<8x4xf32>
    %16 = arith.subf %15, %14 : vector<8x4xf32>
    %17 = math.exp %16 : vector<8x4xf32>
    %18 = math.log1p %17 : vector<8x4xf32>
    %19 = arith.addf %13, %18 : vector<8x4xf32>
    %cst_10 = arith.constant 1.000000e+02 : f32
    %20 = vector.broadcast %cst_10 : f32 to vector<8x4xf32>
    %21 = arith.minimumf %19, %20 : vector<8x4xf32>
    %c0_11 = arith.constant 0 : index
    %c0_12 = arith.constant 0 : index
    %22 = memref.load %arg6[%c0_11, %c0_12] : memref<1x1xf32, #tpu.memory_space<smem>>
    %23 = vector.shape_cast %21 : vector<8x4xf32> to vector<1x8x4xf32>
    %cst_13 = arith.constant dense<0.000000e+00> : vector<1xf32>
    %24 = vector.multi_reduction <add>, %23, %cst_13 [1, 2] : vector<1x8x4xf32> to vector<1xf32>
    %25 = vector.shape_cast %24 : vector<1xf32> to vector<1x1x1xf32>
    %26 = vector.extract %25[0, 0, 0] : f32 from vector<1x1x1xf32>
    %27 = arith.addf %22, %26 : f32
    %c0_14 = arith.constant 0 : index
    %c0_15 = arith.constant 0 : index
    %28 = memref.load %arg6[%c0_14, %c0_15] : memref<1x1xf32, #tpu.memory_space<smem>>
    memref.store %27, %arg6[%c0_14, %c0_15] : memref<1x1xf32, #tpu.memory_space<smem>>
    %c0_16 = arith.constant 0 : index
    %c0_17 = arith.constant 0 : index
    %29 = memref.load %arg6[%c0_16, %c0_17] : memref<1x1xf32, #tpu.memory_space<smem>>
    %cst_18 = arith.constant 3.125000e-02 : f32
    %30 = arith.mulf %29, %cst_18 : f32
    %c0_19 = arith.constant 0 : index
    %c0_20 = arith.constant 0 : index
    %31 = memref.load %arg5[%c0_19, %c0_20] : memref<1x1xf32, #tpu.memory_space<smem>>
    memref.store %30, %arg5[%c0_19, %c0_20] : memref<1x1xf32, #tpu.memory_space<smem>>
    return
  }
  func.func @transform_0(%arg0: i32) -> (i32, i32) {
    %c0_i32 = arith.constant 0 : i32
    %c0_i32_0 = arith.constant 0 : i32
    return %arg0, %c0_i32 : i32, i32
  }
  func.func @transform_1(%arg0: i32) -> (i32, i32) {
    %c0_i32 = arith.constant 0 : i32
    %c0_i32_0 = arith.constant 0 : i32
    %c0_i32_1 = arith.constant 0 : i32
    return %c0_i32, %c0_i32_0 : i32, i32
  }
  func.func @transform_2(%arg0: i32) -> (i32, i32) {
    %c0_i32 = arith.constant 0 : i32
    %c0_i32_0 = arith.constant 0 : i32
    %c0_i32_1 = arith.constant 0 : i32
    return %c0_i32, %c0_i32_0 : i32, i32
  }
  func.func @transform_3(%arg0: i32) -> (i32, i32) {
    %c0_i32 = arith.constant 0 : i32
    %c0_i32_0 = arith.constant 0 : i32
    return %arg0, %c0_i32 : i32, i32
  }
  func.func @transform_4(%arg0: i32) -> (i32, i32) {
    %c0_i32 = arith.constant 0 : i32
    %c0_i32_0 = arith.constant 0 : i32
    %c0_i32_1 = arith.constant 0 : i32
    return %c0_i32, %c0_i32_0 : i32, i32
  }
}

</mosaic_0001>

<llo_original>
// kernel: tpu_custom_call.1
$region0: #{tpu_custom_call.1}
  #allocation0 [shape = 'u32[]', space=smem, size = 0x4, offset = 0x4, fixed_abs, tag = 'smem constant byte address 0x4 - core index']
  #allocation1 [shape = 'u32[144,128]{1,0:T(1,128)}', space=vmem, size = 0x12000, scoped, tag = 'internal scratch']
  #allocation2 [shape = 'f32[1,1]{1,0:T(1,128)}', space=smem, size = 0x200, scoped, tag = 'scratch operand']
  %s0 = inlined_call_operand.vmem [shape: bf16[8,32], index: 0, kind: input, shape index: {}]
  %s1 = inlined_call_operand.vmem [shape: bf16[32,4], index: 1, kind: input, shape index: {}]
  %s2 = inlined_call_operand.vmem [shape: f32[1,4], index: 2, kind: input, shape index: {}]
  %s3 = inlined_call_operand.vmem [shape: f32[8,4], index: 3, kind: input, shape index: {}]
  %s4 = inlined_call_operand.hbm [shape: f32[1,1], index: 4, kind: output, shape index: {}]
  %s5 = sld [smem:[#allocation0]]
  $region30: #{tpu_custom_call.1} parent=0
    _
  %s7 = ssub.s32 1, %s5
  %s8 = scalar_select 0, %s7, %s5
  $region1: #{tpu_custom_call.1} parent=0
    #allocation3 [shape = 'u8[512]{0}', space=smem, size = 0x200, scoped, tag = 'output window, operand 0, single buffered']
    #allocation4 [shape = 's32[1]{0}', space=sflag, size = 0x4, scoped, tag = 'scoped memory for tpu_custom_call.1']
    %9 = vsyncpa [#allocation4], 0
    // Predicated region
    $region2: #{tpu_custom_call.1} parent=1 // pred_check
      _
    $region3: #{tpu_custom_call.1} parent=1 // pred_check_branch
      %11 = sbr.rel (0) target = $region5
    $region4: #{tpu_custom_call.1} parent=1 // pred_region
      _
    $region5: #{tpu_custom_call.1} parent=1 // pred_fallthru
      _
    // Predicated region
    $region6: #{tpu_custom_call.1} parent=1 // pred_check
      _
    $region7: #{tpu_custom_call.1} parent=1 // pred_check_branch
      %13 = sbr.rel (0) target = $region9
    $region8: #{tpu_custom_call.1} parent=1 // pred_region
      _
    $region9: #{tpu_custom_call.1} parent=1 // pred_fallthru
      _
    // Predicated region
    $region10: #{tpu_custom_call.1} parent=1 // pred_check
      _
    $region11: #{tpu_custom_call.1} parent=1 // pred_check_branch
      %15 = sbr.rel (0) target = $region13
    $region12: #{tpu_custom_call.1} parent=1 // pred_region
      _
    $region13: #{tpu_custom_call.1} parent=1 // pred_fallthru
      _
    // Predicated region
    $region14: #{tpu_custom_call.1} parent=1 // pred_check
      _
    $region15: #{tpu_custom_call.1} parent=1 // pred_check_branch
      %17 = sbr.rel (0) target = $region17
    $region16: #{tpu_custom_call.1} parent=1 // pred_region
      _
    $region17: #{tpu_custom_call.1} parent=1 // pred_fallthru
      _
    %p19 = scmp.eq.s32.totalorder 0, 0
    // Predicated region
    $region18: #{tpu_custom_call.1} parent=1 // pred_check
      %p20 = pneg %p19
    $region19: #{tpu_custom_call.1} parent=1 // pred_check_branch
      %22 = sbr.rel (%p20) target = $region21
    $region20: #{tpu_custom_call.1} parent=1 // pred_region
      %s23 = scalar_lea.smem [#allocation2], 0
      %24 = sst [smem:[%s23]] 0.0
    $region21: #{tpu_custom_call.1} parent=1 // pred_fallthru
      _
    %v25 = vld [vmem:[%s0] sm:$0xf]
    %v26 = vld [vmem:[%s1] sm:$0xf]
    %v27 = vld [vmem:[%s1 + $0x4] sm:$0xf]
    %v28 = vld [vmem:[%s1 + $0x8] sm:$0xf]
    %v29 = vld [vmem:[%s1 + $0xc] sm:$0xf]
    %v30 = vld [vmem:[%s2] sm:$0x1]
    %v32 = vlaneseq
    %v33 = vshrl.u32 %v32, 7
    %v34 = vsub.s32 0, %v33
    %v35 = vrot.slane %v30, %v34
    %v41 = vunpack.c.l.b16 %v26
    %v42 = vunpack.c.l.b16 %v27
    %v43 = vunpack.c.l.b16 %v28
    %v44 = vunpack.c.l.b16 %v29
    %v45 = vpack.c.b16 %v42, %v41
    %v46 = vpack.c.b16 %v44, %v43
    %vm49 = vcmask 261120
    %v51 = vsel %vm49, %v25, 0
    %53 = vmatprep.subr.bf16.mxu0 0
    %54 = vmatpush1.bf16.msra.mxu0 %v45
    %55 = vmatprep.subr.bf16.mxu0 0
    %56 = vmatpush1.bf16.msra.mxu0 %v46
    %57 = vmatprep.subr.bf16.mxu0 0
    %58 = vmatpush1.bf16.msra.mxu0 0
    %59 = vmatprep.subr.bf16.mxu0 0
    %60 = vmatpush1.bf16.msra.mxu0 0
    %61 = vmatprep.subr.bf16.mxu0 0
    %62 = vmatpush1.bf16.msra.mxu0 0
    %63 = vmatprep.subr.bf16.mxu0 0
    %64 = vmatpush1.bf16.msra.mxu0 0
    %65 = vmatprep.subr.bf16.mxu0 0
    %66 = vmatpush1.bf16.msra.mxu0 0
    %67 = vmatprep.subr.bf16.mxu0 0
    %68 = vmatpush1.bf16.msra.mxu0 0
    %69 = vmatprep.subr.bf16.mxu0 0
    %70 = vmatpush1.bf16.msra.mxu0 0
    %71 = vmatprep.subr.bf16.mxu0 0
    %72 = vmatpush1.bf16.msra.mxu0 0
    %73 = vmatprep.subr.bf16.mxu0 0
    %74 = vmatpush1.bf16.msra.mxu0 0
    %75 = vmatprep.subr.bf16.mxu0 0
    %76 = vmatpush1.bf16.msra.mxu0 0
    %77 = vmatprep.subr.bf16.mxu0 0
    %78 = vmatpush1.bf16.msra.mxu0 0
    %79 = vmatprep.subr.bf16.mxu0 0
    %80 = vmatpush1.bf16.msra.mxu0 0
    %81 = vmatprep.subr.bf16.mxu0 0
    %82 = vmatpush1.bf16.msra.mxu0 0
    %83 = vmatprep.subr.bf16.mxu0 0
    %84 = vmatpush1.bf16.msra.mxu0 0
    %85 = vmatprep.mubr.bf16.mxu0 0
    %86 = vmatmul.mubr.bf16.gmra.mrb[0].mxu0 %v51
    %v87 = vpop.f32.mrb[0].mxu0
    %v88 = vadd.f32 %v35, %v87
    %v89 = vpop.f32.mrb[0].mxu0
    %v90 = vpop.f32.mrb[0].mxu0
    %v91 = vpop.f32.mrb[0].mxu0
    %92 = vdwg.mxu0
    %v93 = vld [vmem:[%s3] sm:$0xff]
    %v94 = vmax.f32 %v88, 0.0
    %v95 = vmul.f32 %v88, %v93
    %v96 = vsub.f32 %v94, %v95
    %v97 = vand.u32 2147483647, %v88
    %v98 = vsub.f32 0.0, %v97
    %v99 = vmul.f32 %v98, 1.442695
    %v100 = vpow.pop %v99
    %v101 = vadd.f32 %v100, 1.0
    %v102 = vlog2.pop %v101
    %v103 = vmul.f32 %v102, 0.6931472
    %v104 = vmul.f32 -0.5, %v100
    %v105 = vadd.f32 %v104, 1.0
    %v106 = vmul.f32 %v105, %v100
    %v107 = vand.u32 2147483647, %v100
    %vm108 = vcmp.lt.f32.partialorder %v107, 0.0004427343
    %v109 = vsel %vm108, %v106, %v103
    %v110 = vadd.f32 %v96, %v109
    %v111 = vmin.f32 %v110, 100.0
    %s112 = sld [smem:[#allocation2]]
    %vm113 = vcmask 31744
    %v114 = vsel %vm113, %v111, 0.0
    %115 = vadd.xlane.f32.xlu0 %v114
    %v116 = vpop.xlane.xlu0 %115
    %v117 = vrot.slane %v116, 4
    %v118 = vadd.f32 %v116, %v117
    %v119 = vrot.slane %v118, 2
    %v120 = vadd.f32 %v118, %v119
    %v121 = vrot.slane %v120, 1
    %v122 = vadd.f32 %v120, %v121
    %s123 = vtos %v122
    %s124 = sadd.f32 %s112, %s123
    %s125 = scalar_lea.smem [#allocation2], 0
    %126 = sst [smem:[%s125]] %s124
    %s127 = sld [smem:[#allocation2]]
    %s128 = smul.f32 %s127, 0.03125
    %s129 = scalar_lea.smem [#allocation3], 0
    %130 = sst [smem:[%s129]] %s128
    // Predicated region
    $region22: #{tpu_custom_call.1} parent=1 // pred_check
      _
    $region23: #{tpu_custom_call.1} parent=1 // pred_check_branch
      %132 = sbr.rel (0) target = $region25
    $region24: #{tpu_custom_call.1} parent=1 // pred_region
      %s134 = ssub.s32 16, 16
      %135 = vsyncadd [#allocation4], %s134
      %138 = dma.smem_to_hbm [#allocation3], 16, %s4, [#allocation4]
    $region25: #{tpu_custom_call.1} parent=1 // pred_fallthru
      _
    // Predicated region
    $region26: #{tpu_custom_call.1} parent=1 // pred_check
      _
    $region27: #{tpu_custom_call.1} parent=1 // pred_check_branch
      %140 = sbr.rel (0) target = $region29
    $region28: #{tpu_custom_call.1} parent=1 // pred_region
      %141 = dma.done [#allocation4], 16
    $region29: #{tpu_custom_call.1} parent=1 // pred_fallthru
      _
    %142 = sfence
    %143 = vsyncpa [#allocation4], 1

</llo_original>
